<compile_context>
chip_gen: v7x
topology: tpu7x:2x2x1
jax: 0.10.0
libtpu: 0.0.40
codegen_flags: <defaults>
</compile_context>

<pallas_src>
import functools

import jax
import jax.numpy as jnp
import numpy as np
from jax.experimental import pallas as pl
from jax.experimental.pallas import tpu as pltpu


def _tcn_kernel(*refs, level_cfgs, ksize, bb, L, pad_max):
    """Fused TCN forward for one batch tile.

    refs layout:
      x_ref (bb, L, c_in0),
      per level: w1 (k*cin, cout), b1 (1, cout), w2 (k*cout, cout), b2 (1, cout),
                 [wds (cin, cout), bds (1, cout)]  when the level has a downsample,
      w_lin (c_last, out), b_lin (1, out),
      out_ref (bb, 1, out),
      hist_ref (bb, pad_max + L, c_max)   -- zero-padded causal history scratch
    """
    hist_ref = refs[-1]
    out_ref = refs[-2]
    idx = 0
    x_ref = refs[idx]
    idx += 1

    # Zero the causal-history rows once per invocation; taps with t-off < 0
    # read these rows.  Rows >= pad_max are always (re)written before reads.
    if pad_max > 0:
        hist_ref[:, :pad_max, :] = jnp.zeros(
            (bb, pad_max, hist_ref.shape[2]), jnp.float32)

    def causal_conv_relu(h, w_ref, b_ref, dil, cin, cout):
        # h: (bb, L, cin).  Write h once into the padded scratch; each shifted
        # tap is then a static slice (no per-tap zero-concat materialization),
        # and all ksize taps are fused into ONE MXU matmul over k*cin.
        if ksize > 1:
            hist_ref[:, pad_max:pad_max + L, :cin] = h
            taps = []
            for j in range(ksize):
                off = (ksize - 1 - j) * dil
                if off == 0:
                    taps.append(h)
                else:
                    taps.append(
                        hist_ref[:, pad_max - off:pad_max - off + L, :cin])
            hs = jnp.concatenate(taps, axis=-1)          # (bb, L, k*cin)
        else:
            hs = h
        acc = jnp.dot(hs.reshape(bb * L, ksize * cin), w_ref[...],
                      preferred_element_type=jnp.float32)
        # bias + relu fused epilogue (no zero-init / broadcast accumulator).
        return jnp.maximum(acc + b_ref[...], 0.0).reshape(bb, L, cout)

    h = x_ref[...].astype(jnp.float32)                   # (bb, L, c_in0)

    for (dil, has_ds, cin, cout) in level_cfgs:
        w1, b1, w2, b2 = refs[idx], refs[idx + 1], refs[idx + 2], refs[idx + 3]
        idx += 4
        # conv1 -> chomp -> relu -> dropout(id) -> conv2 -> chomp -> relu -> dropout(id)
        y = causal_conv_relu(h, w1, b1, dil, cin, cout)
        y = causal_conv_relu(y, w2, b2, dil, cout, cout)
        if has_ds:
            wds, bds = refs[idx], refs[idx + 1]
            idx += 2
            res = (jnp.dot(h.reshape(bb * L, cin), wds[...],
                           preferred_element_type=jnp.float32)
                   + bds[...]).reshape(bb, L, cout)
        else:
            res = h
        h = jnp.maximum(y + res, 0.0)                    # relu(out + res)

    w_lin, b_lin = refs[idx], refs[idx + 1]
    # y1 = tcn(x)[:, :, -1]  ->  linear(y1)   (fused into the same kernel)
    last = h[:, L - 1, :]                                # (bb, c_last)
    out = jnp.dot(last, w_lin[...],
                  preferred_element_type=jnp.float32) + b_lin[...]
    out_ref[...] = out.reshape(out_ref.shape)


def prepare_tcn_params(level_params, w_lin, b_lin, *, ksize):
    """One-time parameter preparation (hoisted out of the hot path).

    Folds the ksize conv taps into a single (ksize*cin, cout) matmul weight and
    pre-transposes everything, so the per-call forward issues no tiny
    transpose/reshape XLA launches.  weight_norm is assumed already folded into
    the effective conv weights (it is only a reparameterization).

    level_params: list (per TemporalBlock) of
      (w1 (Cout,Cin,k), b1 (Cout,), w2 (Cout,Cout,k), b2 (Cout,),
       wds (Cout,Cin,1) or None, bds (Cout,) or None)
    Returns (flat_param_list, level_cfgs) with
      level_cfgs = tuple of (dilation, has_downsample, cin, cout).
    """
    flat, cfgs = [], []
    for lvl, (w1, b1, w2, b2, wds, bds) in enumerate(level_params):
        dil = 2 ** lvl
        cout, cin, k = w1.shape
        assert k == ksize
        # Row block j of the fused weight <-> tap offset (k-1-j)*dil, matching
        # the tap ordering inside the kernel.
        w1f = jnp.transpose(w1, (2, 1, 0)).reshape(k * cin, cout)
        w2f = jnp.transpose(w2, (2, 1, 0)).reshape(k * cout, cout)
        flat += [w1f, b1.reshape(1, cout), w2f, b2.reshape(1, cout)]
        has_ds = wds is not None
        if has_ds:
            flat += [wds[:, :, 0].T, bds.reshape(1, cout)]
        cfgs.append((dil, has_ds, int(cin), int(cout)))
    out_size, _ = w_lin.shape
    flat += [w_lin.T, b_lin.reshape(1, out_size)]
    flat = [jnp.asarray(a, jnp.float32) for a in flat]
    return flat, tuple(cfgs)


def tcn_forward(x, params_flat, *, level_cfgs, ksize, out_size, batch_block=1):
    """x: (B, C_in, L) in PyTorch layout.  Returns (B, out_size)."""
    B, c_in0, L = x.shape
    x_blc = jnp.transpose(x, (0, 2, 1)).astype(jnp.float32)   # (B, L, C_in)

    num_levels = len(level_cfgs)
    pad_max = (ksize - 1) * (2 ** (num_levels - 1))
    c_max = max([c_in0] + [cout for (_, _, _, cout) in level_cfgs])

    bb = batch_block
    assert B % bb == 0, "batch_block must divide the batch size"
    grid = (B // bb,)

    in_specs = [pl.BlockSpec((bb, L, c_in0), lambda i: (i, 0, 0))]
    # All prepared parameters are small 2-D arrays, fully VMEM-resident.
    in_specs += [pl.BlockSpec(p.shape, lambda i: (0, 0)) for p in params_flat]

    kernel = functools.partial(
        _tcn_kernel, level_cfgs=level_cfgs, ksize=ksize, bb=bb, L=L,
        pad_max=pad_max)

    out3 = pl.pallas_call(
        kernel,
        out_shape=jax.ShapeDtypeStruct((B, 1, out_size), jnp.float32),
        grid=grid,
        in_specs=in_specs,
        out_specs=pl.BlockSpec((bb, 1, out_size), lambda i: (i, 0, 0)),
        scratch_shapes=[pltpu.VMEM((bb, pad_max + L, c_max), jnp.float32)],
        compiler_params=pltpu.CompilerParams(
            dimension_semantics=("parallel",)),   # both TCs on v7x
    )(x_blc, *params_flat)
    return out3.reshape(B, out_size)


def _ref_forward(x, level_params, w_lin, b_lin, *, ksize):
    """Pure-JAX reference mirroring the PyTorch module (inference mode)."""
    hi = jax.lax.Precision.HIGHEST

    def conv(inp, w, b, dil, pad):
        out = jax.lax.conv_general_dilated(
            inp, w, window_strides=(1,), padding=[(pad, pad)],
            rhs_dilation=(dil,), dimension_numbers=("NCH", "OIH", "NCH"),
            precision=hi)
        out = out[:, :, :-pad]                               # Chomp1d
        return out + b[None, :, None]

    h = x
    for lvl, (w1, b1, w2, b2, wds, bds) in enumerate(level_params):
        dil = 2 ** lvl
        pad = (ksize - 1) * dil
        y = jax.nn.relu(conv(h, w1, b1, dil, pad))
        y = jax.nn.relu(conv(y, w2, b2, dil, pad))
        if wds is not None:
            res = jax.lax.conv_general_dilated(
                h, wds, window_strides=(1,), padding="VALID",
                dimension_numbers=("NCH", "OIH", "NCH"),
                precision=hi) + bds[None, :, None]
        else:
            res = h
        h = jax.nn.relu(y + res)
    last = h[:, :, -1]                                       # (B, C_last)
    return jnp.dot(last, w_lin.T, precision=hi) + b_lin[None, :]


if __name__ == "__main__":
    # Small shapes consistent with the module: batch=2, input_size=4,
    # seq length=16, num_channels=[32, 32], kernel_size=2, output_size=1.
    B, INPUT_SIZE, L = 2, 4, 16
    NUM_CHANNELS = [32, 32]
    KSIZE = 2
    OUTPUT_SIZE = 1

    key = jax.random.PRNGKey(0)
    keys = iter(jax.random.split(key, 1 + 6 * len(NUM_CHANNELS) + 2))

    x = jax.random.normal(next(keys), (B, INPUT_SIZE, L), dtype=jnp.float32)

    # Parameters (PyTorch shapes). Conv weights ~ N(0, 0.01) per init_weights;
    # biases ~ nn.Conv1d default uniform. weight_norm is folded in (identity
    # reparameterization for these effective weights).
    level_params = []
    c_in = INPUT_SIZE
    for c_out in NUM_CHANNELS:
        b1_bound = 1.0 / np.sqrt(c_in * KSIZE)
        b2_bound = 1.0 / np.sqrt(c_out * KSIZE)
        w1 = 0.01 * jax.random.normal(next(keys), (c_out, c_in, KSIZE), jnp.float32)
        b1 = jax.random.uniform(next(keys), (c_out,), jnp.float32, -b1_bound, b1_bound)
        w2 = 0.01 * jax.random.normal(next(keys), (c_out, c_out, KSIZE), jnp.float32)
        b2 = jax.random.uniform(next(keys), (c_out,), jnp.float32, -b2_bound, b2_bound)
        if c_in != c_out:
            ds_bound = 1.0 / np.sqrt(c_in)
            wds = 0.01 * jax.random.normal(next(keys), (c_out, c_in, 1), jnp.float32)
            bds = jax.random.uniform(next(keys), (c_out,), jnp.float32, -ds_bound, ds_bound)
        else:
            wds, bds = None, None
            _ = next(keys)
            _ = next(keys)
        level_params.append((w1, b1, w2, b2, wds, bds))
        c_in = c_out

    lin_bound = 1.0 / np.sqrt(NUM_CHANNELS[-1])
    w_lin = 0.01 * jax.random.normal(next(keys), (OUTPUT_SIZE, NUM_CHANNELS[-1]),
                                     jnp.float32)
    b_lin = jax.random.uniform(next(keys), (OUTPUT_SIZE,), jnp.float32,
                               -lin_bound, lin_bound)

    # One-time parameter prep (fused tap weights, pre-transposed) -- outside
    # the hot path / jit.
    params_flat, level_cfgs = prepare_tcn_params(
        level_params, w_lin, b_lin, ksize=KSIZE)

    fwd = jax.jit(functools.partial(
        tcn_forward, level_cfgs=level_cfgs, ksize=KSIZE,
        out_size=OUTPUT_SIZE, batch_block=1))
    y = jax.block_until_ready(fwd(x, params_flat))

    y_ref = _ref_forward(x, level_params, w_lin, b_lin, ksize=KSIZE)

    assert y.shape == (B, OUTPUT_SIZE)
    np.testing.assert_allclose(np.asarray(y), np.asarray(y_ref),
                               rtol=1e-4, atol=1e-5)
    print("KERNEL_OK")
</pallas_src>

<mosaic_0001>
module attributes {stable_mosaic.version = 11 : i64} {
  func.func @_tcn_kernel(%arg0: i32, %arg1: memref<1x16x4xf32, #tpu.memory_space<vmem>>, %arg2: memref<8x32xf32, #tpu.memory_space<vmem>>, %arg3: memref<1x32xf32, #tpu.memory_space<vmem>>, %arg4: memref<64x32xf32, #tpu.memory_space<vmem>>, %arg5: memref<1x32xf32, #tpu.memory_space<vmem>>, %arg6: memref<4x32xf32, #tpu.memory_space<vmem>>, %arg7: memref<1x32xf32, #tpu.memory_space<vmem>>, %arg8: memref<64x32xf32, #tpu.memory_space<vmem>>, %arg9: memref<1x32xf32, #tpu.memory_space<vmem>>, %arg10: memref<64x32xf32, #tpu.memory_space<vmem>>, %arg11: memref<1x32xf32, #tpu.memory_space<vmem>>, %arg12: memref<32x1xf32, #tpu.memory_space<vmem>>, %arg13: memref<1x1xf32, #tpu.memory_space<vmem>>, %arg14: memref<1x1x1xf32, #tpu.memory_space<vmem>>, %arg15: memref<1x18x32xf32, #tpu.memory_space<vmem>>) attributes {dimension_semantics = [#tpu.dimension_semantics<parallel>], iteration_bounds = array<i64: 2>, scalar_prefetch = 0 : i64, scratch_operands = 1 : i64, tpu.core_type = #tpu.core_type<tc>, window_params = [{transform_indices = @transform_0, window_bounds = array<i64: 1, 16, 4>}, {pipeline_mode = #tpu.pipeline_mode<synchronous>, transform_indices = @transform_1, window_bounds = array<i64: 8, 32>}, {pipeline_mode = #tpu.pipeline_mode<synchronous>, transform_indices = @transform_2, window_bounds = array<i64: 1, 32>}, {pipeline_mode = #tpu.pipeline_mode<synchronous>, transform_indices = @transform_3, window_bounds = array<i64: 64, 32>}, {pipeline_mode = #tpu.pipeline_mode<synchronous>, transform_indices = @transform_4, window_bounds = array<i64: 1, 32>}, {pipeline_mode = #tpu.pipeline_mode<synchronous>, transform_indices = @transform_5, window_bounds = array<i64: 4, 32>}, {pipeline_mode = #tpu.pipeline_mode<synchronous>, transform_indices = @transform_6, window_bounds = array<i64: 1, 32>}, {pipeline_mode = #tpu.pipeline_mode<synchronous>, transform_indices = @transform_7, window_bounds = array<i64: 64, 32>}, {pipeline_mode = #tpu.pipeline_mode<synchronous>, transform_indices = @transform_8, window_bounds = array<i64: 1, 32>}, {pipeline_mode = #tpu.pipeline_mode<synchronous>, transform_indices = @transform_9, window_bounds = array<i64: 64, 32>}, {pipeline_mode = #tpu.pipeline_mode<synchronous>, transform_indices = @transform_10, window_bounds = array<i64: 1, 32>}, {pipeline_mode = #tpu.pipeline_mode<synchronous>, transform_indices = @transform_11, window_bounds = array<i64: 32, 1>}, {pipeline_mode = #tpu.pipeline_mode<synchronous>, transform_indices = @transform_12, window_bounds = array<i64: 1, 1>}, {transform_indices = @transform_13, window_bounds = array<i64: 1, 1, 1>}]} {
    %cst = arith.constant 0.000000e+00 : f32
    %0 = vector.broadcast %cst : f32 to vector<1x2x32xf32>
    %c0 = arith.constant 0 : index
    %c0_0 = arith.constant 0 : index
    %c0_1 = arith.constant 0 : index
    %1 = vector.load %arg15[%c0, %c0_0, %c0_1] : memref<1x18x32xf32, #tpu.memory_space<vmem>>, vector<1x2x32xf32>
    tpu.vector_store %arg15[%c0, %c0_0, %c0_1], %0 {strides = array<i32>} : memref<1x18x32xf32, #tpu.memory_space<vmem>>, vector<1x2x32xf32>,
    %c0_2 = arith.constant 0 : index
    %c0_3 = arith.constant 0 : index
    %c0_4 = arith.constant 0 : index
    %2 = vector.load %arg1[%c0_2, %c0_3, %c0_4] : memref<1x16x4xf32, #tpu.memory_space<vmem>>, vector<1x16x4xf32>
    %c0_5 = arith.constant 0 : index
    %c2 = arith.constant 2 : index
    %c0_6 = arith.constant 0 : index
    %3 = vector.load %arg15[%c0_5, %c2, %c0_6] : memref<1x18x32xf32, #tpu.memory_space<vmem>>, vector<1x16x4xf32>
    tpu.vector_store %arg15[%c0_5, %c2, %c0_6], %2 {strides = array<i32>} : memref<1x18x32xf32, #tpu.memory_space<vmem>>, vector<1x16x4xf32>,
    %c0_7 = arith.constant 0 : index
    %c1 = arith.constant 1 : index
    %c0_8 = arith.constant 0 : index
    %4 = vector.load %arg15[%c0_7, %c1, %c0_8] : memref<1x18x32xf32, #tpu.memory_space<vmem>>, vector<1x16x4xf32>
    %5 = tpu.concatenate %4, %2 in 2 : vector<1x16x4xf32>, vector<1x16x4xf32> -> vector<1x16x8xf32>
    %6 = vector.shape_cast %5 : vector<1x16x8xf32> to vector<16x8xf32>
    %c0_9 = arith.constant 0 : index
    %c0_10 = arith.constant 0 : index
    %7 = vector.load %arg2[%c0_9, %c0_10] : memref<8x32xf32, #tpu.memory_space<vmem>>, vector<8x32xf32>
    %cst_11 = arith.constant dense<0.000000e+00> : vector<16x32xf32>
    %8 = tpu.matmul %6, %7, %cst_11 {dimension_numbers = #tpu.dot_dimension_numbers<[1], [0], [0], [1], [0, 0, 1, 1], [], []>} : vector<16x8xf32>, vector<8x32xf32>, vector<16x32xf32> -> vector<16x32xf32>
    %c0_12 = arith.constant 0 : index
    %c0_13 = arith.constant 0 : index
    %9 = vector.load %arg3[%c0_12, %c0_13] : memref<1x32xf32, #tpu.memory_space<vmem>>, vector<1x32xf32>
    %10 = vector.broadcast %9 : vector<1x32xf32> to vector<16x32xf32>
    %11 = arith.addf %8, %10 : vector<16x32xf32>
    %cst_14 = arith.constant 0.000000e+00 : f32
    %12 = vector.broadcast %cst_14 : f32 to vector<16x32xf32>
    %13 = arith.maximumf %11, %12 : vector<16x32xf32>
    %14 = vector.shape_cast %13 : vector<16x32xf32> to vector<1x16x32xf32>
    %c0_15 = arith.constant 0 : index
    %c2_16 = arith.constant 2 : index
    %c0_17 = arith.constant 0 : index
    %15 = vector.load %arg15[%c0_15, %c2_16, %c0_17] : memref<1x18x32xf32, #tpu.memory_space<vmem>>, vector<1x16x32xf32>
    tpu.vector_store %arg15[%c0_15, %c2_16, %c0_17], %14 {strides = array<i32>} : memref<1x18x32xf32, #tpu.memory_space<vmem>>, vector<1x16x32xf32>,
    %c0_18 = arith.constant 0 : index
    %c1_19 = arith.constant 1 : index
    %c0_20 = arith.constant 0 : index
    %16 = vector.load %arg15[%c0_18, %c1_19, %c0_20] : memref<1x18x32xf32, #tpu.memory_space<vmem>>, vector<1x16x32xf32>
    %17 = tpu.concatenate %16, %14 in 2 : vector<1x16x32xf32>, vector<1x16x32xf32> -> vector<1x16x64xf32>
    %18 = vector.shape_cast %17 : vector<1x16x64xf32> to vector<16x64xf32>
    %c0_21 = arith.constant 0 : index
    %c0_22 = arith.constant 0 : index
    %19 = vector.load %arg4[%c0_21, %c0_22] : memref<64x32xf32, #tpu.memory_space<vmem>>, vector<64x32xf32>
    %cst_23 = arith.constant dense<0.000000e+00> : vector<16x32xf32>
    %20 = tpu.matmul %18, %19, %cst_23 {dimension_numbers = #tpu.dot_dimension_numbers<[1], [0], [0], [1], [0, 0, 1, 1], [], []>} : vector<16x64xf32>, vector<64x32xf32>, vector<16x32xf32> -> vector<16x32xf32>
    %c0_24 = arith.constant 0 : index
    %c0_25 = arith.constant 0 : index
    %21 = vector.load %arg5[%c0_24, %c0_25] : memref<1x32xf32, #tpu.memory_space<vmem>>, vector<1x32xf32>
    %22 = vector.broadcast %21 : vector<1x32xf32> to vector<16x32xf32>
    %23 = arith.addf %20, %22 : vector<16x32xf32>
    %cst_26 = arith.constant 0.000000e+00 : f32
    %24 = vector.broadcast %cst_26 : f32 to vector<16x32xf32>
    %25 = arith.maximumf %23, %24 : vector<16x32xf32>
    %26 = vector.shape_cast %25 : vector<16x32xf32> to vector<1x16x32xf32>
    %27 = vector.shape_cast %2 : vector<1x16x4xf32> to vector<16x4xf32>
    %c0_27 = arith.constant 0 : index
    %c0_28 = arith.constant 0 : index
    %28 = vector.load %arg6[%c0_27, %c0_28] : memref<4x32xf32, #tpu.memory_space<vmem>>, vector<4x32xf32>
    %cst_29 = arith.constant dense<0.000000e+00> : vector<16x32xf32>
    %29 = tpu.matmul %27, %28, %cst_29 {dimension_numbers = #tpu.dot_dimension_numbers<[1], [0], [0], [1], [0, 0, 1, 1], [], []>} : vector<16x4xf32>, vector<4x32xf32>, vector<16x32xf32> -> vector<16x32xf32>
    %c0_30 = arith.constant 0 : index
    %c0_31 = arith.constant 0 : index
    %30 = vector.load %arg7[%c0_30, %c0_31] : memref<1x32xf32, #tpu.memory_space<vmem>>, vector<1x32xf32>
    %31 = vector.broadcast %30 : vector<1x32xf32> to vector<16x32xf32>
    %32 = arith.addf %29, %31 : vector<16x32xf32>
    %33 = vector.shape_cast %32 : vector<16x32xf32> to vector<1x16x32xf32>
    %34 = arith.addf %26, %33 : vector<1x16x32xf32>
    %cst_32 = arith.constant 0.000000e+00 : f32
    %35 = vector.broadcast %cst_32 : f32 to vector<1x16x32xf32>
    %36 = arith.maximumf %34, %35 : vector<1x16x32xf32>
    %c0_33 = arith.constant 0 : index
    %c2_34 = arith.constant 2 : index
    %c0_35 = arith.constant 0 : index
    %37 = vector.load %arg15[%c0_33, %c2_34, %c0_35] : memref<1x18x32xf32, #tpu.memory_space<vmem>>, vector<1x16x32xf32>
    tpu.vector_store %arg15[%c0_33, %c2_34, %c0_35], %36 {strides = array<i32>} : memref<1x18x32xf32, #tpu.memory_space<vmem>>, vector<1x16x32xf32>,
    %c0_36 = arith.constant 0 : index
    %c0_37 = arith.constant 0 : index
    %c0_38 = arith.constant 0 : index
    %38 = vector.load %arg15[%c0_36, %c0_37, %c0_38] : memref<1x18x32xf32, #tpu.memory_space<vmem>>, vector<1x16x32xf32>
    %39 = tpu.concatenate %38, %36 in 2 : vector<1x16x32xf32>, vector<1x16x32xf32> -> vector<1x16x64xf32>
    %40 = vector.shape_cast %39 : vector<1x16x64xf32> to vector<16x64xf32>
    %c0_39 = arith.constant 0 : index
    %c0_40 = arith.constant 0 : index
    %41 = vector.load %arg8[%c0_39, %c0_40] : memref<64x32xf32, #tpu.memory_space<vmem>>, vector<64x32xf32>
    %cst_41 = arith.constant dense<0.000000e+00> : vector<16x32xf32>
    %42 = tpu.matmul %40, %41, %cst_41 {dimension_numbers = #tpu.dot_dimension_numbers<[1], [0], [0], [1], [0, 0, 1, 1], [], []>} : vector<16x64xf32>, vector<64x32xf32>, vector<16x32xf32> -> vector<16x32xf32>
    %c0_42 = arith.constant 0 : index
    %c0_43 = arith.constant 0 : index
    %43 = vector.load %arg9[%c0_42, %c0_43] : memref<1x32xf32, #tpu.memory_space<vmem>>, vector<1x32xf32>
    %44 = vector.broadcast %43 : vector<1x32xf32> to vector<16x32xf32>
    %45 = arith.addf %42, %44 : vector<16x32xf32>
    %cst_44 = arith.constant 0.000000e+00 : f32
    %46 = vector.broadcast %cst_44 : f32 to vector<16x32xf32>
    %47 = arith.maximumf %45, %46 : vector<16x32xf32>
    %48 = vector.shape_cast %47 : vector<16x32xf32> to vector<1x16x32xf32>
    %c0_45 = arith.constant 0 : index
    %c2_46 = arith.constant 2 : index
    %c0_47 = arith.constant 0 : index
    %49 = vector.load %arg15[%c0_45, %c2_46, %c0_47] : memref<1x18x32xf32, #tpu.memory_space<vmem>>, vector<1x16x32xf32>
    tpu.vector_store %arg15[%c0_45, %c2_46, %c0_47], %48 {strides = array<i32>} : memref<1x18x32xf32, #tpu.memory_space<vmem>>, vector<1x16x32xf32>,
    %c0_48 = arith.constant 0 : index
    %c0_49 = arith.constant 0 : index
    %c0_50 = arith.constant 0 : index
    %50 = vector.load %arg15[%c0_48, %c0_49, %c0_50] : memref<1x18x32xf32, #tpu.memory_space<vmem>>, vector<1x16x32xf32>
    %51 = tpu.concatenate %50, %48 in 2 : vector<1x16x32xf32>, vector<1x16x32xf32> -> vector<1x16x64xf32>
    %52 = vector.shape_cast %51 : vector<1x16x64xf32> to vector<16x64xf32>
    %c0_51 = arith.constant 0 : index
    %c0_52 = arith.constant 0 : index
    %53 = vector.load %arg10[%c0_51, %c0_52] : memref<64x32xf32, #tpu.memory_space<vmem>>, vector<64x32xf32>
    %cst_53 = arith.constant dense<0.000000e+00> : vector<16x32xf32>
    %54 = tpu.matmul %52, %53, %cst_53 {dimension_numbers = #tpu.dot_dimension_numbers<[1], [0], [0], [1], [0, 0, 1, 1], [], []>} : vector<16x64xf32>, vector<64x32xf32>, vector<16x32xf32> -> vector<16x32xf32>
    %c0_54 = arith.constant 0 : index
    %c0_55 = arith.constant 0 : index
    %55 = vector.load %arg11[%c0_54, %c0_55] : memref<1x32xf32, #tpu.memory_space<vmem>>, vector<1x32xf32>
    %56 = vector.broadcast %55 : vector<1x32xf32> to vector<16x32xf32>
    %57 = arith.addf %54, %56 : vector<16x32xf32>
    %cst_56 = arith.constant 0.000000e+00 : f32
    %58 = vector.broadcast %cst_56 : f32 to vector<16x32xf32>
    %59 = arith.maximumf %57, %58 : vector<16x32xf32>
    %60 = vector.shape_cast %59 : vector<16x32xf32> to vector<1x16x32xf32>
    %61 = arith.addf %60, %36 : vector<1x16x32xf32>
    %cst_57 = arith.constant 0.000000e+00 : f32
    %62 = vector.broadcast %cst_57 : f32 to vector<1x16x32xf32>
    %63 = arith.maximumf %61, %62 : vector<1x16x32xf32>
    %64 = vector.extract_strided_slice %63 {offsets = [0, 15, 0], sizes = [1, 1, 32], strides = [1, 1, 1]} : vector<1x16x32xf32> to vector<1x1x32xf32>
    %65 = vector.shape_cast %64 : vector<1x1x32xf32> to vector<1x32xf32>
    %c0_58 = arith.constant 0 : index
    %c0_59 = arith.constant 0 : index
    %66 = vector.load %arg12[%c0_58, %c0_59] : memref<32x1xf32, #tpu.memory_space<vmem>>, vector<32x1xf32>
    %cst_60 = arith.constant dense<0.000000e+00> : vector<1x1xf32>
    %67 = tpu.matmul %65, %66, %cst_60 {dimension_numbers = #tpu.dot_dimension_numbers<[1], [0], [0], [1], [0, 0, 1, 1], [], []>} : vector<1x32xf32>, vector<32x1xf32>, vector<1x1xf32> -> vector<1x1xf32>
    %c0_61 = arith.constant 0 : index
    %c0_62 = arith.constant 0 : index
    %68 = vector.load %arg13[%c0_61, %c0_62] : memref<1x1xf32, #tpu.memory_space<vmem>>, vector<1x1xf32>
    %69 = arith.addf %67, %68 : vector<1x1xf32>
    %70 = vector.shape_cast %69 : vector<1x1xf32> to vector<1x1x1xf32>
    %c0_63 = arith.constant 0 : index
    %c0_64 = arith.constant 0 : index
    %c0_65 = arith.constant 0 : index
    %71 = vector.load %arg14[%c0_63, %c0_64, %c0_65] : memref<1x1x1xf32, #tpu.memory_space<vmem>>, vector<1x1x1xf32>
    tpu.vector_store %arg14[%c0_63, %c0_64, %c0_65], %70 {strides = array<i32>} : memref<1x1x1xf32, #tpu.memory_space<vmem>>, vector<1x1x1xf32>,
    return
  }
  func.func @transform_0(%arg0: i32) -> (i32, i32, i32) {
    %c0_i32 = arith.constant 0 : i32
    %c0_i32_0 = arith.constant 0 : i32
    %c0_i32_1 = arith.constant 0 : i32
    return %arg0, %c0_i32, %c0_i32_0 : i32, i32, i32
  }
  func.func @transform_1(%arg0: i32) -> (i32, i32) {
    %c0_i32 = arith.constant 0 : i32
    %c0_i32_0 = arith.constant 0 : i32
    %c0_i32_1 = arith.constant 0 : i32
    return %c0_i32, %c0_i32_0 : i32, i32
  }
  func.func @transform_2(%arg0: i32) -> (i32, i32) {
    %c0_i32 = arith.constant 0 : i32
    %c0_i32_0 = arith.constant 0 : i32
    %c0_i32_1 = arith.constant 0 : i32
    return %c0_i32, %c0_i32_0 : i32, i32
  }
  func.func @transform_3(%arg0: i32) -> (i32, i32) {
    %c0_i32 = arith.constant 0 : i32
    %c0_i32_0 = arith.constant 0 : i32
    %c0_i32_1 = arith.constant 0 : i32
    return %c0_i32, %c0_i32_0 : i32, i32
  }
  func.func @transform_4(%arg0: i32) -> (i32, i32) {
    %c0_i32 = arith.constant 0 : i32
    %c0_i32_0 = arith.constant 0 : i32
    %c0_i32_1 = arith.constant 0 : i32
    return %c0_i32, %c0_i32_0 : i32, i32
  }
  func.func @transform_5(%arg0: i32) -> (i32, i32) {
    %c0_i32 = arith.constant 0 : i32
    %c0_i32_0 = arith.constant 0 : i32
    %c0_i32_1 = arith.constant 0 : i32
    return %c0_i32, %c0_i32_0 : i32, i32
  }
  func.func @transform_6(%arg0: i32) -> (i32, i32) {
    %c0_i32 = arith.constant 0 : i32
    %c0_i32_0 = arith.constant 0 : i32
    %c0_i32_1 = arith.constant 0 : i32
    return %c0_i32, %c0_i32_0 : i32, i32
  }
  func.func @transform_7(%arg0: i32) -> (i32, i32) {
    %c0_i32 = arith.constant 0 : i32
    %c0_i32_0 = arith.constant 0 : i32
    %c0_i32_1 = arith.constant 0 : i32
    return %c0_i32, %c0_i32_0 : i32, i32
  }
  func.func @transform_8(%arg0: i32) -> (i32, i32) {
    %c0_i32 = arith.constant 0 : i32
    %c0_i32_0 = arith.constant 0 : i32
    %c0_i32_1 = arith.constant 0 : i32
    return %c0_i32, %c0_i32_0 : i32, i32
  }
  func.func @transform_9(%arg0: i32) -> (i32, i32) {
    %c0_i32 = arith.constant 0 : i32
    %c0_i32_0 = arith.constant 0 : i32
    %c0_i32_1 = arith.constant 0 : i32
    return %c0_i32, %c0_i32_0 : i32, i32
  }
  func.func @transform_10(%arg0: i32) -> (i32, i32) {
    %c0_i32 = arith.constant 0 : i32
    %c0_i32_0 = arith.constant 0 : i32
    %c0_i32_1 = arith.constant 0 : i32
    return %c0_i32, %c0_i32_0 : i32, i32
  }
  func.func @transform_11(%arg0: i32) -> (i32, i32) {
    %c0_i32 = arith.constant 0 : i32
    %c0_i32_0 = arith.constant 0 : i32
    %c0_i32_1 = arith.constant 0 : i32
    return %c0_i32, %c0_i32_0 : i32, i32
  }
  func.func @transform_12(%arg0: i32) -> (i32, i32) {
    %c0_i32 = arith.constant 0 : i32
    %c0_i32_0 = arith.constant 0 : i32
    %c0_i32_1 = arith.constant 0 : i32
    return %c0_i32, %c0_i32_0 : i32, i32
  }
  func.func @transform_13(%arg0: i32) -> (i32, i32, i32) {
    %c0_i32 = arith.constant 0 : i32
    %c0_i32_0 = arith.constant 0 : i32
    %c0_i32_1 = arith.constant 0 : i32
    return %arg0, %c0_i32, %c0_i32_0 : i32, i32, i32
  }
}

</mosaic_0001>

<llo_original>
// kernel: tcn_forward.1
$region0: #{tcn_forward.1}
  #allocation0 [shape = 'u32[]', space=smem, size = 0x4, offset = 0x4, fixed_abs, tag = 'smem constant byte address 0x4 - core index']
  #allocation1 [shape = 'u32[144,128]{1,0:T(1,128)}', space=vmem, size = 0x12000, scoped, tag = 'internal scratch']
  #allocation2 [shape = 'f32[1,18,32]{2,1,0:T(8,128)}', space=vmem, size = 0x3000, scoped, tag = 'scratch operand']
  #allocation3 [shape = 'f32[1,1]{1,0:T(1,128)S(1)}', space=vmem, size = 0x200, scoped, tag = 'scoped memory for tcn_forward.1']
  %s0 = inlined_call_operand.vmem [shape: f32[2,16,4], index: 0, kind: input, shape index: {}]
  %s1 = inlined_call_operand.vmem [shape: f32[8,32], index: 1, kind: input, shape index: {}]
  %s2 = inlined_call_operand.vmem [shape: f32[1,32], index: 2, kind: input, shape index: {}]
  %s3 = inlined_call_operand.vmem [shape: f32[64,32], index: 3, kind: input, shape index: {}]
  %s4 = inlined_call_operand.vmem [shape: f32[1,32], index: 4, kind: input, shape index: {}]
  %s5 = inlined_call_operand.vmem [shape: f32[4,32], index: 5, kind: input, shape index: {}]
  %s6 = inlined_call_operand.vmem [shape: f32[1,32], index: 6, kind: input, shape index: {}]
  %s7 = inlined_call_operand.vmem [shape: f32[64,32], index: 7, kind: input, shape index: {}]
  %s8 = inlined_call_operand.vmem [shape: f32[1,32], index: 8, kind: input, shape index: {}]
  %s9 = inlined_call_operand.vmem [shape: f32[64,32], index: 9, kind: input, shape index: {}]
  %s10 = inlined_call_operand.vmem [shape: f32[1,32], index: 10, kind: input, shape index: {}]
  %s11 = inlined_call_operand.vmem [shape: f32[32,1], index: 11, kind: input, shape index: {}]
  %s12 = inlined_call_operand.<no memory space> [shape: f32[1,1], index: 12, kind: input, shape index: {}]
  %s13 = inlined_call_operand.vmem [shape: f32[2,1,1], index: 13, kind: output, shape index: {}]
  %s14 = sld [smem:[#allocation0]]
  $region85: #{tcn_forward.1} parent=0
    _
  %s16 = ssub.s32 1, %s14
  %s17 = scalar_select 0, %s16, %s14
  %v18 = vstv %s12
  %19 = vst [vmem:[#allocation3] sm:$0x1] %v18
  loop: start=0, step=1, limit=4
  $region2: #{tcn_forward.1} parent=0 // loop_pre_header
    _
  $region3: #{tcn_forward.1} parent=0 // loop_header
    %s21 = sphi 0, %s25
    %p22 = scmp.ge.s32.totalorder %s21, 4
    %s31 = sphi 0, %s33
    %s34 = sphi 0, %s31
    %s35 = sphi 0, %s34
    %s51 = sphi 0, %s35
    %s55 = sphi 0, %s55
    %s57 = sphi 0, %s55
    %s58 = sphi 0, %s57
    %s72 = sphi 0, %s58
    %s76 = sphi 0, %s76
    %s78 = sphi 0, %s76
    %s79 = sphi 0, %s78
    %s93 = sphi 0, %s79
    %s97 = sphi 0, %s97
    %s99 = sphi 0, %s97
    %s100 = sphi 0, %s99
    %s114 = sphi 0, %s100
    %s118 = sphi 0, %s118
    %s120 = sphi 0, %s118
    %s121 = sphi 0, %s120
    %s135 = sphi 0, %s121
    %s139 = sphi 0, %s139
    %s141 = sphi 0, %s139
    %s142 = sphi 0, %s141
    %s156 = sphi 0, %s142
    %s160 = sphi 0, %s160
    %s162 = sphi 0, %s160
    %s163 = sphi 0, %s162
    %s177 = sphi 0, %s163
    %s181 = sphi 0, %s181
    %s183 = sphi 0, %s181
    %s184 = sphi 0, %s183
    %s198 = sphi 0, %s184
    %s202 = sphi 0, %s202
    %s204 = sphi 0, %s202
    %s205 = sphi 0, %s204
    %s219 = sphi 0, %s205
    %s223 = sphi 0, %s223
    %s225 = sphi 0, %s223
    %s226 = sphi 0, %s225
    %s240 = sphi 0, %s226
    %s244 = sphi 0, %s244
    %s246 = sphi 0, %s244
    %s247 = sphi 0, %s246
    %s261 = sphi 0, %s247
    %s265 = sphi 0, %s265
    %s267 = sphi 0, %s265
    %s268 = sphi 0, %s267
    %s282 = sphi 0, %s268
    %s286 = sphi 0, %s286
    %s288 = sphi 0, %s286
    %s289 = sphi 0, %s288
    %s303 = sphi 0, %s289
    %s309 = sphi 0, %s311
    %s312 = sphi 0, %s309
    %s313 = sphi 0, %s312
    %s329 = sphi 0, %s313
  $region4: #{tcn_forward.1} parent=0 // loop_header_branch
    %24 = sbr.rel (%p22) target = $region8
  $region5: #{tcn_forward.1} parent=0 // loop_body
    %s26 = ssub.s32 %s21, 1
    %s27 = ssub.s32 %s21, 2
    %s28 = sadd.s32 %s21, 1
    %s29 = ssub.s32 %s21, %s28
    %p30 = scmp.eq.s32.totalorder %s29, 0
    %s32 = sadd.s32 %s31, 1
    %s33 = scalar_select %p30, %s31, %s32
    %p36 = pneg %p30
    %p37 = scmp.eq.s32.totalorder %s21, 1
    %p38 = por %p36, %p37
    %p39 = scmp.ne.s32.totalorder %s31, %s34
    %p40 = scmp.eq.s32.totalorder %s21, 0
    %p41 = por %p39, %p40
    %p42 = scmp.ne.s32.totalorder %s31, %s34
    %p43 = scmp.eq.s32.totalorder %s26, 1
    %p44 = por %p42, %p43
    %p45 = scmp.ne.s32.totalorder %s34, %s35
    %p46 = scmp.eq.s32.totalorder %s26, 0
    %p47 = por %p45, %p46
    %p48 = scmp.ne.s32.totalorder %s34, %s35
    %p49 = scmp.eq.s32.totalorder %s27, 1
    %p50 = por %p48, %p49
    %p52 = scmp.ne.s32.totalorder %s35, %s51
    %p53 = scmp.eq.s32.totalorder %s27, 0
    %p54 = por %p52, %p53
    %s56 = sadd.s32 %s55, 1
    %p59 = scmp.eq.s32.totalorder %s21, 1
    %p60 = scmp.ne.s32.totalorder %s55, %s57
    %p61 = scmp.eq.s32.totalorder %s21, 0
    %p62 = por %p60, %p61
    %p63 = scmp.ne.s32.totalorder %s55, %s57
    %p64 = scmp.eq.s32.totalorder %s26, 1
    %p65 = por %p63, %p64
    %p66 = scmp.ne.s32.totalorder %s57, %s58
    %p67 = scmp.eq.s32.totalorder %s26, 0
    %p68 = por %p66, %p67
    %p69 = scmp.ne.s32.totalorder %s57, %s58
    %p70 = scmp.eq.s32.totalorder %s27, 1
    %p71 = por %p69, %p70
    %p73 = scmp.ne.s32.totalorder %s58, %s72
    %p74 = scmp.eq.s32.totalorder %s27, 0
    %p75 = por %p73, %p74
    %s77 = sadd.s32 %s76, 1
    %p80 = scmp.eq.s32.totalorder %s21, 1
    %p81 = scmp.ne.s32.totalorder %s76, %s78
    %p82 = scmp.eq.s32.totalorder %s21, 0
    %p83 = por %p81, %p82
    %p84 = scmp.ne.s32.totalorder %s76, %s78
    %p85 = scmp.eq.s32.totalorder %s26, 1
    %p86 = por %p84, %p85
    %p87 = scmp.ne.s32.totalorder %s78, %s79
    %p88 = scmp.eq.s32.totalorder %s26, 0
    %p89 = por %p87, %p88
    %p90 = scmp.ne.s32.totalorder %s78, %s79
    %p91 = scmp.eq.s32.totalorder %s27, 1
    %p92 = por %p90, %p91
    %p94 = scmp.ne.s32.totalorder %s79, %s93
    %p95 = scmp.eq.s32.totalorder %s27, 0
    %p96 = por %p94, %p95
    %s98 = sadd.s32 %s97, 1
    %p101 = scmp.eq.s32.totalorder %s21, 1
    %p102 = scmp.ne.s32.totalorder %s97, %s99
    %p103 = scmp.eq.s32.totalorder %s21, 0
    %p104 = por %p102, %p103
    %p105 = scmp.ne.s32.totalorder %s97, %s99
    %p106 = scmp.eq.s32.totalorder %s26, 1
    %p107 = por %p105, %p106
    %p108 = scmp.ne.s32.totalorder %s99, %s100
    %p109 = scmp.eq.s32.totalorder %s26, 0
    %p110 = por %p108, %p109
    %p111 = scmp.ne.s32.totalorder %s99, %s100
    %p112 = scmp.eq.s32.totalorder %s27, 1
    %p113 = por %p111, %p112
    %p115 = scmp.ne.s32.totalorder %s100, %s114
    %p116 = scmp.eq.s32.totalorder %s27, 0
    %p117 = por %p115, %p116
    %s119 = sadd.s32 %s118, 1
    %p122 = scmp.eq.s32.totalorder %s21, 1
    %p123 = scmp.ne.s32.totalorder %s118, %s120
    %p124 = scmp.eq.s32.totalorder %s21, 0
    %p125 = por %p123, %p124
    %p126 = scmp.ne.s32.totalorder %s118, %s120
    %p127 = scmp.eq.s32.totalorder %s26, 1
    %p128 = por %p126, %p127
    %p129 = scmp.ne.s32.totalorder %s120, %s121
    %p130 = scmp.eq.s32.totalorder %s26, 0
    %p131 = por %p129, %p130
    %p132 = scmp.ne.s32.totalorder %s120, %s121
    %p133 = scmp.eq.s32.totalorder %s27, 1
    %p134 = por %p132, %p133
    %p136 = scmp.ne.s32.totalorder %s121, %s135
    %p137 = scmp.eq.s32.totalorder %s27, 0
    %p138 = por %p136, %p137
    %s140 = sadd.s32 %s139, 1
    %p143 = scmp.eq.s32.totalorder %s21, 1
    %p144 = scmp.ne.s32.totalorder %s139, %s141
    %p145 = scmp.eq.s32.totalorder %s21, 0
    %p146 = por %p144, %p145
    %p147 = scmp.ne.s32.totalorder %s139, %s141
    %p148 = scmp.eq.s32.totalorder %s26, 1
    %p149 = por %p147, %p148
    %p150 = scmp.ne.s32.totalorder %s141, %s142
    %p151 = scmp.eq.s32.totalorder %s26, 0
    %p152 = por %p150, %p151
    %p153 = scmp.ne.s32.totalorder %s141, %s142
    %p154 = scmp.eq.s32.totalorder %s27, 1
    %p155 = por %p153, %p154
    %p157 = scmp.ne.s32.totalorder %s142, %s156
    %p158 = scmp.eq.s32.totalorder %s27, 0
    %p159 = por %p157, %p158
    %s161 = sadd.s32 %s160, 1
    %p164 = scmp.eq.s32.totalorder %s21, 1
    %p165 = scmp.ne.s32.totalorder %s160, %s162
    %p166 = scmp.eq.s32.totalorder %s21, 0
    %p167 = por %p165, %p166
    %p168 = scmp.ne.s32.totalorder %s160, %s162
    %p169 = scmp.eq.s32.totalorder %s26, 1
    %p170 = por %p168, %p169
    %p171 = scmp.ne.s32.totalorder %s162, %s163
    %p172 = scmp.eq.s32.totalorder %s26, 0
    %p173 = por %p171, %p172
    %p174 = scmp.ne.s32.totalorder %s162, %s163
    %p175 = scmp.eq.s32.totalorder %s27, 1
    %p176 = por %p174, %p175
    %p178 = scmp.ne.s32.totalorder %s163, %s177
    %p179 = scmp.eq.s32.totalorder %s27, 0
    %p180 = por %p178, %p179
    %s182 = sadd.s32 %s181, 1
    %p185 = scmp.eq.s32.totalorder %s21, 1
    %p186 = scmp.ne.s32.totalorder %s181, %s183
    %p187 = scmp.eq.s32.totalorder %s21, 0
    %p188 = por %p186, %p187
    %p189 = scmp.ne.s32.totalorder %s181, %s183
    %p190 = scmp.eq.s32.totalorder %s26, 1
    %p191 = por %p189, %p190
    %p192 = scmp.ne.s32.totalorder %s183, %s184
    %p193 = scmp.eq.s32.totalorder %s26, 0
    %p194 = por %p192, %p193
    %p195 = scmp.ne.s32.totalorder %s183, %s184
    %p196 = scmp.eq.s32.totalorder %s27, 1
    %p197 = por %p195, %p196
    %p199 = scmp.ne.s32.totalorder %s184, %s198
    %p200 = scmp.eq.s32.totalorder %s27, 0
    %p201 = por %p199, %p200
    %s203 = sadd.s32 %s202, 1
    %p206 = scmp.eq.s32.totalorder %s21, 1
    %p207 = scmp.ne.s32.totalorder %s202, %s204
    %p208 = scmp.eq.s32.totalorder %s21, 0
    %p209 = por %p207, %p208
    %p210 = scmp.ne.s32.totalorder %s202, %s204
    %p211 = scmp.eq.s32.totalorder %s26, 1
    %p212 = por %p210, %p211
    %p213 = scmp.ne.s32.totalorder %s204, %s205
    %p214 = scmp.eq.s32.totalorder %s26, 0
    %p215 = por %p213, %p214
    %p216 = scmp.ne.s32.totalorder %s204, %s205
    %p217 = scmp.eq.s32.totalorder %s27, 1
    %p218 = por %p216, %p217
    %p220 = scmp.ne.s32.totalorder %s205, %s219
    %p221 = scmp.eq.s32.totalorder %s27, 0
    %p222 = por %p220, %p221
    %s224 = sadd.s32 %s223, 1
    %p227 = scmp.eq.s32.totalorder %s21, 1
    %p228 = scmp.ne.s32.totalorder %s223, %s225
    %p229 = scmp.eq.s32.totalorder %s21, 0
    %p230 = por %p228, %p229
    %p231 = scmp.ne.s32.totalorder %s223, %s225
    %p232 = scmp.eq.s32.totalorder %s26, 1
    %p233 = por %p231, %p232
    %p234 = scmp.ne.s32.totalorder %s225, %s226
    %p235 = scmp.eq.s32.totalorder %s26, 0
    %p236 = por %p234, %p235
    %p237 = scmp.ne.s32.totalorder %s225, %s226
    %p238 = scmp.eq.s32.totalorder %s27, 1
    %p239 = por %p237, %p238
    %p241 = scmp.ne.s32.totalorder %s226, %s240
    %p242 = scmp.eq.s32.totalorder %s27, 0
    %p243 = por %p241, %p242
    %s245 = sadd.s32 %s244, 1
    %p248 = scmp.eq.s32.totalorder %s21, 1
    %p249 = scmp.ne.s32.totalorder %s244, %s246
    %p250 = scmp.eq.s32.totalorder %s21, 0
    %p251 = por %p249, %p250
    %p252 = scmp.ne.s32.totalorder %s244, %s246
    %p253 = scmp.eq.s32.totalorder %s26, 1
    %p254 = por %p252, %p253
    %p255 = scmp.ne.s32.totalorder %s246, %s247
    %p256 = scmp.eq.s32.totalorder %s26, 0
    %p257 = por %p255, %p256
    %p258 = scmp.ne.s32.totalorder %s246, %s247
    %p259 = scmp.eq.s32.totalorder %s27, 1
    %p260 = por %p258, %p259
    %p262 = scmp.ne.s32.totalorder %s247, %s261
    %p263 = scmp.eq.s32.totalorder %s27, 0
    %p264 = por %p262, %p263
    %s266 = sadd.s32 %s265, 1
    %p269 = scmp.eq.s32.totalorder %s21, 1
    %p270 = scmp.ne.s32.totalorder %s265, %s267
    %p271 = scmp.eq.s32.totalorder %s21, 0
    %p272 = por %p270, %p271
    %p273 = scmp.ne.s32.totalorder %s265, %s267
    %p274 = scmp.eq.s32.totalorder %s26, 1
    %p275 = por %p273, %p274
    %p276 = scmp.ne.s32.totalorder %s267, %s268
    %p277 = scmp.eq.s32.totalorder %s26, 0
    %p278 = por %p276, %p277
    %p279 = scmp.ne.s32.totalorder %s267, %s268
    %p280 = scmp.eq.s32.totalorder %s27, 1
    %p281 = por %p279, %p280
    %p283 = scmp.ne.s32.totalorder %s268, %s282
    %p284 = scmp.eq.s32.totalorder %s27, 0
    %p285 = por %p283, %p284
    %s287 = sadd.s32 %s286, 1
    %p290 = scmp.eq.s32.totalorder %s21, 1
    %p291 = scmp.ne.s32.totalorder %s286, %s288
    %p292 = scmp.eq.s32.totalorder %s21, 0
    %p293 = por %p291, %p292
    %p294 = scmp.ne.s32.totalorder %s286, %s288
    %p295 = scmp.eq.s32.totalorder %s26, 1
    %p296 = por %p294, %p295
    %p297 = scmp.ne.s32.totalorder %s288, %s289
    %p298 = scmp.eq.s32.totalorder %s26, 0
    %p299 = por %p297, %p298
    %p300 = scmp.ne.s32.totalorder %s288, %s289
    %p301 = scmp.eq.s32.totalorder %s27, 1
    %p302 = por %p300, %p301
    %p304 = scmp.ne.s32.totalorder %s289, %s303
    %p305 = scmp.eq.s32.totalorder %s27, 0
    %p306 = por %p304, %p305
    %s307 = ssub.s32 %s21, %s28
    %p308 = scmp.eq.s32.totalorder %s307, 0
    %s310 = sadd.s32 %s309, 1
    %s311 = scalar_select %p308, %s309, %s310
    %p314 = pneg %p308
    %p315 = scmp.eq.s32.totalorder %s21, 1
    %p316 = por %p314, %p315
    %p317 = scmp.ne.s32.totalorder %s309, %s312
    %p318 = scmp.eq.s32.totalorder %s21, 0
    %p319 = por %p317, %p318
    %p320 = scmp.ne.s32.totalorder %s309, %s312
    %p321 = scmp.eq.s32.totalorder %s26, 1
    %p322 = por %p320, %p321
    %p323 = scmp.ne.s32.totalorder %s312, %s313
    %p324 = scmp.eq.s32.totalorder %s26, 0
    %p325 = por %p323, %p324
    %p326 = scmp.ne.s32.totalorder %s312, %s313
    %p327 = scmp.eq.s32.totalorder %s27, 1
    %p328 = por %p326, %p327
    %p330 = scmp.ne.s32.totalorder %s313, %s329
    %p331 = scmp.eq.s32.totalorder %s27, 0
    %p332 = por %p330, %p331
    %p333 = scmp.le.s32.totalorder 1, %s21
    %p334 = scmp.lt.s32.totalorder %s21, 3
    %p335 = pnand %p333, %p334
    %p336 = pneg %p335
    // Predicated region
    $region9: #{tcn_forward.1} parent=5 // pred_check
      _
    $region10: #{tcn_forward.1} parent=5 // pred_check_branch
      %338 = sbr.rel (%p335) target = $region12
    $region11: #{tcn_forward.1} parent=5 // pred_region
      %s339 = ssub.s32 %s21, 1
      // Predicated region
      $region13: #{tcn_forward.1} parent=11 // pred_check
        %p340 = pneg %p68
      $region14: #{tcn_forward.1} parent=11 // pred_check_branch
        %342 = sbr.rel (%p340) target = $region16
      $region15: #{tcn_forward.1} parent=11 // pred_region
        _
      $region16: #{tcn_forward.1} parent=11 // pred_fallthru
        _
      // Predicated region
      $region17: #{tcn_forward.1} parent=11 // pred_check
        %p343 = pneg %p89
      $region18: #{tcn_forward.1} parent=11 // pred_check_branch
        %345 = sbr.rel (%p343) target = $region20
      $region19: #{tcn_forward.1} parent=11 // pred_region
        _
      $region20: #{tcn_forward.1} parent=11 // pred_fallthru
        _
      // Predicated region
      $region21: #{tcn_forward.1} parent=11 // pred_check
        %p346 = pneg %p110
      $region22: #{tcn_forward.1} parent=11 // pred_check_branch
        %348 = sbr.rel (%p346) target = $region24
      $region23: #{tcn_forward.1} parent=11 // pred_region
        _
      $region24: #{tcn_forward.1} parent=11 // pred_fallthru
        _
      // Predicated region
      $region25: #{tcn_forward.1} parent=11 // pred_check
        %p349 = pneg %p131
      $region26: #{tcn_forward.1} parent=11 // pred_check_branch
        %351 = sbr.rel (%p349) target = $region28
      $region27: #{tcn_forward.1} parent=11 // pred_region
        _
      $region28: #{tcn_forward.1} parent=11 // pred_fallthru
        _
      // Predicated region
      $region29: #{tcn_forward.1} parent=11 // pred_check
        %p352 = pneg %p152
      $region30: #{tcn_forward.1} parent=11 // pred_check_branch
        %354 = sbr.rel (%p352) target = $region32
      $region31: #{tcn_forward.1} parent=11 // pred_region
        _
      $region32: #{tcn_forward.1} parent=11 // pred_fallthru
        _
      // Predicated region
      $region33: #{tcn_forward.1} parent=11 // pred_check
        %p355 = pneg %p173
      $region34: #{tcn_forward.1} parent=11 // pred_check_branch
        %357 = sbr.rel (%p355) target = $region36
      $region35: #{tcn_forward.1} parent=11 // pred_region
        _
      $region36: #{tcn_forward.1} parent=11 // pred_fallthru
        _
      // Predicated region
      $region37: #{tcn_forward.1} parent=11 // pred_check
        %p358 = pneg %p194
      $region38: #{tcn_forward.1} parent=11 // pred_check_branch
        %360 = sbr.rel (%p358) target = $region40
      $region39: #{tcn_forward.1} parent=11 // pred_region
        _
      $region40: #{tcn_forward.1} parent=11 // pred_fallthru
        _
      // Predicated region
      $region41: #{tcn_forward.1} parent=11 // pred_check
        %p361 = pneg %p215
      $region42: #{tcn_forward.1} parent=11 // pred_check_branch
        %363 = sbr.rel (%p361) target = $region44
      $region43: #{tcn_forward.1} parent=11 // pred_region
        _
      $region44: #{tcn_forward.1} parent=11 // pred_fallthru
        _
      // Predicated region
      $region45: #{tcn_forward.1} parent=11 // pred_check
        %p364 = pneg %p236
      $region46: #{tcn_forward.1} parent=11 // pred_check_branch
        %366 = sbr.rel (%p364) target = $region48
      $region47: #{tcn_forward.1} parent=11 // pred_region
        _
      $region48: #{tcn_forward.1} parent=11 // pred_fallthru
        _
      // Predicated region
      $region49: #{tcn_forward.1} parent=11 // pred_check
        %p367 = pneg %p257
      $region50: #{tcn_forward.1} parent=11 // pred_check_branch
        %369 = sbr.rel (%p367) target = $region52
      $region51: #{tcn_forward.1} parent=11 // pred_region
        _
      $region52: #{tcn_forward.1} parent=11 // pred_fallthru
        _
      // Predicated region
      $region53: #{tcn_forward.1} parent=11 // pred_check
        %p370 = pneg %p278
      $region54: #{tcn_forward.1} parent=11 // pred_check_branch
        %372 = sbr.rel (%p370) target = $region56
      $region55: #{tcn_forward.1} parent=11 // pred_region
        _
      $region56: #{tcn_forward.1} parent=11 // pred_fallthru
        _
      // Predicated region
      $region57: #{tcn_forward.1} parent=11 // pred_check
        %p373 = pneg %p299
      $region58: #{tcn_forward.1} parent=11 // pred_check_branch
        %375 = sbr.rel (%p373) target = $region60
      $region59: #{tcn_forward.1} parent=11 // pred_region
        _
      $region60: #{tcn_forward.1} parent=11 // pred_fallthru
        _
    $region12: #{tcn_forward.1} parent=5 // pred_fallthru
      _
    %p376 = scmp.lt.s32.totalorder %s21, 2
    // Predicated region
    $region61: #{tcn_forward.1} parent=5 // pred_check
      %p377 = pneg %p376
    $region62: #{tcn_forward.1} parent=5 // pred_check_branch
      %379 = sbr.rel (%p377) target = $region64
    $region63: #{tcn_forward.1} parent=5 // pred_region
      // Predicated region
      $region65: #{tcn_forward.1} parent=63 // pred_check
        %p380 = pneg %p41
      $region66: #{tcn_forward.1} parent=63 // pred_check_branch
        %382 = sbr.rel (%p380) target = $region68
      $region67: #{tcn_forward.1} parent=63 // pred_region
        %p383 = scmp.lt.s32.totalorder %s21, 1
        %s384 = scalar_select %p383, %s21, 1
        %s385 = smul.addr %s384, 2
        %s386 = smul.addr %s385, 8
        %s387 = scalar_lea.vmem %s0, %s386
      $region68: #{tcn_forward.1} parent=63 // pred_fallthru
        _
    $region64: #{tcn_forward.1} parent=5 // pred_fallthru
      _
    %p388 = scmp.le.s32.totalorder 1, %s21
    %p389 = scmp.lt.s32.totalorder %s21, 3
    %p390 = pnand %p388, %p389
    %p391 = pneg %p390
    // Predicated region
    $region69: #{tcn_forward.1} parent=5 // pred_check
      _
    $region70: #{tcn_forward.1} parent=5 // pred_check_branch
      %393 = sbr.rel (%p390) target = $region72
    $region71: #{tcn_forward.1} parent=5 // pred_region
      %s394 = ssub.s32 %s21, 1
      %p395 = scmp.lt.s32.totalorder %s26, 1
      %s396 = scalar_select %p395, %s26, 1
      %s397 = smul.addr %s396, 2
      %s398 = smul.addr %s397, 8
      %s399 = scalar_lea.vmem %s0, %s398
      %p400 = pneg %p47
      %p401 = pneg %p44
      %p402 = pneg %p68
      %p403 = pneg %p65
      %p404 = pneg %p89
      %p405 = pneg %p86
      %p406 = pneg %p110
      %p407 = pneg %p107
      %p408 = pneg %p131
      %p409 = pneg %p128
      %p410 = pneg %p152
      %p411 = pneg %p149
      %p412 = pneg %p173
      %p413 = pneg %p170
      %p414 = pneg %p194
      %p415 = pneg %p191
      %p416 = pneg %p215
      %p417 = pneg %p212
      %p418 = pneg %p236
      %p419 = pneg %p233
      %p420 = pneg %p257
      %p421 = pneg %p254
      %p422 = pneg %p278
      %p423 = pneg %p275
      %p424 = pneg %p299
      %p425 = pneg %p296
      %p426 = pneg %p325
      %p427 = pneg %p322
      %p428 = scmp.lt.s32.totalorder %s26, 1
      %s429 = scalar_select %p428, %s26, 1
      %s430 = scalar_lea.vmem %s13, %s429
      %p431 = scmp.lt.s32.totalorder %s26, 1
      %s432 = scalar_select %p431, %s26, 1
      %s433 = smul.addr %s432, 2
      %s434 = smul.addr %s433, 8
      %s435 = scalar_lea.vmem %s0, %s434
      %p436 = scmp.lt.s32.totalorder %s26, 1
      %s437 = scalar_select %p436, %s26, 1
      %s438 = scalar_lea.vmem %s13, %s437
      %vm439 = vcmask 254976
      %440 = vst.msk [vmem:[#allocation2] sm:$0x3] %vm439, 0.0
      %v441 = vld [vmem:[%s435] sm:$0xff]
      %v442 = vld [vmem:[%s435 + $0x8] sm:$0xff]
      %vm443 = vcmask 31744
      %444 = vst.msk [vmem:[#allocation2 + $0x2] sm:$0xff] %vm443, %v441
      %445 = vst.msk [vmem:[#allocation2 + $0xa] sm:$0xff] %vm443, %v442
      %v446 = vld [vmem:[#allocation2 + $0x1] sm:$0xff]
      %v447 = vld [vmem:[#allocation2 + $0x9] sm:$0xff]
      %450 = vrot.lane.b32.xlu0 %v441, 4
      %v451 = vpop.permute.xlu0 %450
      %452 = vrot.lane.b32.xlu0 %v442, 4
      %v453 = vpop.permute.xlu0 %452
      %v456 = vsel %vm443, %v446, %v451
      %v457 = vsel %vm443, %v447, %v453
      %v458 = vld [vmem:[%s1] sm:$0xff]
      %v459 = vld [vmem:[%s2] sm:$0x1]
      %v461 = vlaneseq
      %v462 = vshrl.u32 %v461, 7
      %v463 = vsub.s32 0, %v462
      %v464 = vrot.slane %v459, %v463
      %vm466 = vcmask 64512
      %v468 = vsel %vm466, %v456, 0
      %v471 = vsel %vm466, %v457, 0
      %473 = vmatprep.subr.mxu0 0.0
      %474 = vmatpush1.msra.mxu0 %v458
      %475 = vmatprep.subr.mxu0 0.0
      %476 = vmatpush1.msra.mxu0 0.0
      %477 = vmatprep.subr.mxu0 0.0
      %478 = vmatpush1.msra.mxu0 0.0
      %479 = vmatprep.subr.mxu0 0.0
      %480 = vmatpush1.msra.mxu0 0.0
      %481 = vmatprep.subr.mxu0 0.0
      %482 = vmatpush1.msra.mxu0 0.0
      %483 = vmatprep.subr.mxu0 0.0
      %484 = vmatpush1.msra.mxu0 0.0
      %485 = vmatprep.subr.mxu0 0.0
      %486 = vmatpush1.msra.mxu0 0.0
      %487 = vmatprep.subr.mxu0 0.0
      %488 = vmatpush1.msra.mxu0 0.0
      %489 = vmatprep.subr.mxu0 0.0
      %490 = vmatpush1.msra.mxu0 0.0
      %491 = vmatprep.subr.mxu0 0.0
      %492 = vmatpush1.msra.mxu0 0.0
      %493 = vmatprep.subr.mxu0 0.0
      %494 = vmatpush1.msra.mxu0 0.0
      %495 = vmatprep.subr.mxu0 0.0
      %496 = vmatpush1.msra.mxu0 0.0
      %497 = vmatprep.subr.mxu0 0.0
      %498 = vmatpush1.msra.mxu0 0.0
      %499 = vmatprep.subr.mxu0 0.0
      %500 = vmatpush1.msra.mxu0 0.0
      %501 = vmatprep.subr.mxu0 0.0
      %502 = vmatpush1.msra.mxu0 0.0
      %503 = vmatprep.subr.mxu0 0.0
      %504 = vmatpush1.msra.mxu0 0.0
      %505 = vmatprep.subr.mxu0 0.0
      %506 = vmatpush1.msra.mxu0 0.0
      %507 = vmatprep.subr.mxu0 0.0
      %508 = vmatpush1.msra.mxu0 0.0
      %509 = vmatprep.subr.mxu0 0.0
      %510 = vmatpush1.msra.mxu0 0.0
      %511 = vmatprep.subr.mxu0 0.0
      %512 = vmatpush1.msra.mxu0 0.0
      %513 = vmatprep.subr.mxu0 0.0
      %514 = vmatpush1.msra.mxu0 0.0
      %515 = vmatprep.subr.mxu0 0.0
      %516 = vmatpush1.msra.mxu0 0.0
      %517 = vmatprep.subr.mxu0 0.0
      %518 = vmatpush1.msra.mxu0 0.0
      %519 = vmatprep.subr.mxu0 0.0
      %520 = vmatpush1.msra.mxu0 0.0
      %521 = vmatprep.subr.mxu0 0.0
      %522 = vmatpush1.msra.mxu0 0.0
      %523 = vmatprep.subr.mxu0 0.0
      %524 = vmatpush1.msra.mxu0 0.0
      %525 = vmatprep.subr.mxu0 0.0
      %526 = vmatpush1.msra.mxu0 0.0
      %527 = vmatprep.subr.mxu0 0.0
      %528 = vmatpush1.msra.mxu0 0.0
      %529 = vmatprep.subr.mxu0 0.0
      %530 = vmatpush1.msra.mxu0 0.0
      %531 = vmatprep.subr.mxu0 0.0
      %532 = vmatpush1.msra.mxu0 0.0
      %533 = vmatprep.subr.mxu0 0.0
      %534 = vmatpush1.msra.mxu0 0.0
      %535 = vmatprep.subr.mxu0 0.0
      %536 = vmatpush1.msra.mxu0 0.0
      %537 = vmatprep.mubr.f32.mxu0 0.0
      %538 = vmatmul.mubr.f32.gmra.mrb[0].mxu0 %v468
      %v539 = vpop.f32.mrb[0].mxu0
      %v540 = vadd.f32 %v464, %v539
      %v541 = vpop.f32.mrb[0].mxu0
      %542 = vmatprep.mubr.f32.mxu0 0.0
      %543 = vmatmul.mubr.f32.gmra.mrb[0].mxu0 %v471
      %v544 = vpop.f32.mrb[0].mxu0
      %v545 = vadd.f32 %v464, %v544
      %v546 = vpop.f32.mrb[0].mxu0
      %547 = vdwg.mxu0
      %v548 = vmax.f32 %v540, 0.0
      %v549 = vmax.f32 %v545, 0.0
      %vm550 = vcmask 261120
      %551 = vst.msk [vmem:[#allocation2 + $0x2] sm:$0xff] %vm550, %v548
      %552 = vst.msk [vmem:[#allocation2 + $0xa] sm:$0xff] %vm550, %v549
      %v553 = vld [vmem:[#allocation2 + $0x1] sm:$0xff]
      %v554 = vld [vmem:[#allocation2 + $0x9] sm:$0xff]
      %557 = vrot.lane.b32.xlu0 %v548, 32
      %v558 = vpop.permute.xlu0 %557
      %559 = vrot.lane.b32.xlu0 %v549, 32
      %v560 = vpop.permute.xlu0 %559
      %v563 = vsel %vm550, %v553, %v558
      %v564 = vsel %vm550, %v554, %v560
      %v565 = vld [vmem:[%s3] sm:$0xff]
      %v566 = vld [vmem:[%s3 + $0x8] sm:$0xff]
      %v567 = vld [vmem:[%s3 + $0x10] sm:$0xff]
      %v568 = vld [vmem:[%s3 + $0x18] sm:$0xff]
      %v569 = vld [vmem:[%s3 + $0x20] sm:$0xff]
      %v570 = vld [vmem:[%s3 + $0x28] sm:$0xff]
      %v571 = vld [vmem:[%s3 + $0x30] sm:$0xff]
      %v572 = vld [vmem:[%s3 + $0x38] sm:$0xff]
      %v573 = vld [vmem:[%s4] sm:$0x1]
      %v575 = vlaneseq
      %v576 = vshrl.u32 %v575, 7
      %v577 = vsub.s32 0, %v576
      %v578 = vrot.slane %v573, %v577
      %vm580 = vcmask 523264
      %v582 = vsel %vm580, %v563, 0
      %v585 = vsel %vm580, %v564, 0
      %587 = vmatprep.subr.mxu0 0.0
      %588 = vmatpush1.msra.mxu0 %v565
      %589 = vmatprep.subr.mxu0 0.0
      %590 = vmatpush1.msra.mxu0 %v566
      %591 = vmatprep.subr.mxu0 0.0
      %592 = vmatpush1.msra.mxu0 %v567
      %593 = vmatprep.subr.mxu0 0.0
      %594 = vmatpush1.msra.mxu0 %v568
      %595 = vmatprep.subr.mxu0 0.0
      %596 = vmatpush1.msra.mxu0 %v569
      %597 = vmatprep.subr.mxu0 0.0
      %598 = vmatpush1.msra.mxu0 %v570
      %599 = vmatprep.subr.mxu0 0.0
      %600 = vmatpush1.msra.mxu0 %v571
      %601 = vmatprep.subr.mxu0 0.0
      %602 = vmatpush1.msra.mxu0 %v572
      %603 = vmatprep.subr.mxu0 0.0
      %604 = vmatpush1.msra.mxu0 0.0
      %605 = vmatprep.subr.mxu0 0.0
      %606 = vmatpush1.msra.mxu0 0.0
      %607 = vmatprep.subr.mxu0 0.0
      %608 = vmatpush1.msra.mxu0 0.0
      %609 = vmatprep.subr.mxu0 0.0
      %610 = vmatpush1.msra.mxu0 0.0
      %611 = vmatprep.subr.mxu0 0.0
      %612 = vmatpush1.msra.mxu0 0.0
      %613 = vmatprep.subr.mxu0 0.0
      %614 = vmatpush1.msra.mxu0 0.0
      %615 = vmatprep.subr.mxu0 0.0
      %616 = vmatpush1.msra.mxu0 0.0
      %617 = vmatprep.subr.mxu0 0.0
      %618 = vmatpush1.msra.mxu0 0.0
      %619 = vmatprep.subr.mxu0 0.0
      %620 = vmatpush1.msra.mxu0 0.0
      %621 = vmatprep.subr.mxu0 0.0
      %622 = vmatpush1.msra.mxu0 0.0
      %623 = vmatprep.subr.mxu0 0.0
      %624 = vmatpush1.msra.mxu0 0.0
      %625 = vmatprep.subr.mxu0 0.0
      %626 = vmatpush1.msra.mxu0 0.0
      %627 = vmatprep.subr.mxu0 0.0
      %628 = vmatpush1.msra.mxu0 0.0
      %629 = vmatprep.subr.mxu0 0.0
      %630 = vmatpush1.msra.mxu0 0.0
      %631 = vmatprep.subr.mxu0 0.0
      %632 = vmatpush1.msra.mxu0 0.0
      %633 = vmatprep.subr.mxu0 0.0
      %634 = vmatpush1.msra.mxu0 0.0
      %635 = vmatprep.subr.mxu0 0.0
      %636 = vmatpush1.msra.mxu0 0.0
      %637 = vmatprep.subr.mxu0 0.0
      %638 = vmatpush1.msra.mxu0 0.0
      %639 = vmatprep.subr.mxu0 0.0
      %640 = vmatpush1.msra.mxu0 0.0
      %641 = vmatprep.subr.mxu0 0.0
      %642 = vmatpush1.msra.mxu0 0.0
      %643 = vmatprep.subr.mxu0 0.0
      %644 = vmatpush1.msra.mxu0 0.0
      %645 = vmatprep.subr.mxu0 0.0
      %646 = vmatpush1.msra.mxu0 0.0
      %647 = vmatprep.subr.mxu0 0.0
      %648 = vmatpush1.msra.mxu0 0.0
      %649 = vmatprep.subr.mxu0 0.0
      %650 = vmatpush1.msra.mxu0 0.0
      %651 = vmatprep.mubr.f32.mxu0 0.0
      %652 = vmatmul.mubr.f32.gmra.mrb[0].mxu0 %v582
      %v653 = vpop.f32.mrb[0].mxu0
      %v654 = vadd.f32 %v578, %v653
      %v655 = vpop.f32.mrb[0].mxu0
      %656 = vmatprep.mubr.f32.mxu0 0.0
      %657 = vmatmul.mubr.f32.gmra.mrb[0].mxu0 %v585
      %v658 = vpop.f32.mrb[0].mxu0
      %v659 = vadd.f32 %v578, %v658
      %v660 = vpop.f32.mrb[0].mxu0
      %661 = vdwg.mxu0
      %v662 = vmax.f32 %v654, 0.0
      %v663 = vmax.f32 %v659, 0.0
      %v664 = vld [vmem:[%s5] sm:$0xf]
      %v665 = vld [vmem:[%s6] sm:$0x1]
      %v667 = vlaneseq
      %v668 = vshrl.u32 %v667, 7
      %v669 = vsub.s32 0, %v668
      %v670 = vrot.slane %v665, %v669
      %v672 = vsel %vm443, %v441, 0
      %v674 = vsel %vm443, %v442, 0
      %vm676 = vcmask 1043456
      %v678 = vsel %vm676, %v664, 0
      %680 = vmatprep.subr.mxu0 0.0
      %681 = vmatpush1.msra.mxu0 %v678
      %682 = vmatprep.subr.mxu0 0.0
      %683 = vmatpush1.msra.mxu0 0.0
      %684 = vmatprep.subr.mxu0 0.0
      %685 = vmatpush1.msra.mxu0 0.0
      %686 = vmatprep.subr.mxu0 0.0
      %687 = vmatpush1.msra.mxu0 0.0
      %688 = vmatprep.subr.mxu0 0.0
      %689 = vmatpush1.msra.mxu0 0.0
      %690 = vmatprep.subr.mxu0 0.0
      %691 = vmatpush1.msra.mxu0 0.0
      %692 = vmatprep.subr.mxu0 0.0
      %693 = vmatpush1.msra.mxu0 0.0
      %694 = vmatprep.subr.mxu0 0.0
      %695 = vmatpush1.msra.mxu0 0.0
      %696 = vmatprep.subr.mxu0 0.0
      %697 = vmatpush1.msra.mxu0 0.0
      %698 = vmatprep.subr.mxu0 0.0
      %699 = vmatpush1.msra.mxu0 0.0
      %700 = vmatprep.subr.mxu0 0.0
      %701 = vmatpush1.msra.mxu0 0.0
      %702 = vmatprep.subr.mxu0 0.0
      %703 = vmatpush1.msra.mxu0 0.0
      %704 = vmatprep.subr.mxu0 0.0
      %705 = vmatpush1.msra.mxu0 0.0
      %706 = vmatprep.subr.mxu0 0.0
      %707 = vmatpush1.msra.mxu0 0.0
      %708 = vmatprep.subr.mxu0 0.0
      %709 = vmatpush1.msra.mxu0 0.0
      %710 = vmatprep.subr.mxu0 0.0
      %711 = vmatpush1.msra.mxu0 0.0
      %712 = vmatprep.subr.mxu0 0.0
      %713 = vmatpush1.msra.mxu0 0.0
      %714 = vmatprep.subr.mxu0 0.0
      %715 = vmatpush1.msra.mxu0 0.0
      %716 = vmatprep.subr.mxu0 0.0
      %717 = vmatpush1.msra.mxu0 0.0
      %718 = vmatprep.subr.mxu0 0.0
      %719 = vmatpush1.msra.mxu0 0.0
      %720 = vmatprep.subr.mxu0 0.0
      %721 = vmatpush1.msra.mxu0 0.0
      %722 = vmatprep.subr.mxu0 0.0
      %723 = vmatpush1.msra.mxu0 0.0
      %724 = vmatprep.subr.mxu0 0.0
      %725 = vmatpush1.msra.mxu0 0.0
      %726 = vmatprep.subr.mxu0 0.0
      %727 = vmatpush1.msra.mxu0 0.0
      %728 = vmatprep.subr.mxu0 0.0
      %729 = vmatpush1.msra.mxu0 0.0
      %730 = vmatprep.subr.mxu0 0.0
      %731 = vmatpush1.msra.mxu0 0.0
      %732 = vmatprep.subr.mxu0 0.0
      %733 = vmatpush1.msra.mxu0 0.0
      %734 = vmatprep.subr.mxu0 0.0
      %735 = vmatpush1.msra.mxu0 0.0
      %736 = vmatprep.subr.mxu0 0.0
      %737 = vmatpush1.msra.mxu0 0.0
      %738 = vmatprep.subr.mxu0 0.0
      %739 = vmatpush1.msra.mxu0 0.0
      %740 = vmatprep.subr.mxu0 0.0
      %741 = vmatpush1.msra.mxu0 0.0
      %742 = vmatprep.subr.mxu0 0.0
      %743 = vmatpush1.msra.mxu0 0.0
      %744 = vmatprep.mubr.f32.mxu0 0.0
      %745 = vmatmul.mubr.f32.gmra.mrb[0].mxu0 %v672
      %v746 = vpop.f32.mrb[0].mxu0
      %v747 = vadd.f32 %v670, %v746
      %v748 = vpop.f32.mrb[0].mxu0
      %749 = vmatprep.mubr.f32.mxu0 0.0
      %750 = vmatmul.mubr.f32.gmra.mrb[0].mxu0 %v674
      %v751 = vpop.f32.mrb[0].mxu0
      %v752 = vadd.f32 %v670, %v751
      %v753 = vpop.f32.mrb[0].mxu0
      %754 = vdwg.mxu0
      %v755 = vadd.f32 %v662, %v747
      %v756 = vadd.f32 %v663, %v752
      %v757 = vmax.f32 %v755, 0.0
      %v758 = vmax.f32 %v756, 0.0
      %759 = vst.msk [vmem:[#allocation2 + $0x2] sm:$0xff] %vm550, %v757
      %760 = vst.msk [vmem:[#allocation2 + $0xa] sm:$0xff] %vm550, %v758
      %v761 = vld [vmem:[#allocation2] sm:$0xff]
      %v762 = vld [vmem:[#allocation2 + $0x8] sm:$0xff]
      %765 = vrot.lane.b32.xlu0 %v757, 32
      %v766 = vpop.permute.xlu0 %765
      %767 = vrot.lane.b32.xlu0 %v758, 32
      %v768 = vpop.permute.xlu0 %767
      %v771 = vsel %vm550, %v761, %v766
      %v772 = vsel %vm550, %v762, %v768
      %v773 = vld [vmem:[%s7] sm:$0xff]
      %v774 = vld [vmem:[%s7 + $0x8] sm:$0xff]
      %v775 = vld [vmem:[%s7 + $0x10] sm:$0xff]
      %v776 = vld [vmem:[%s7 + $0x18] sm:$0xff]
      %v777 = vld [vmem:[%s7 + $0x20] sm:$0xff]
      %v778 = vld [vmem:[%s7 + $0x28] sm:$0xff]
      %v779 = vld [vmem:[%s7 + $0x30] sm:$0xff]
      %v780 = vld [vmem:[%s7 + $0x38] sm:$0xff]
      %v781 = vld [vmem:[%s8] sm:$0x1]
      %v783 = vlaneseq
      %v784 = vshrl.u32 %v783, 7
      %v785 = vsub.s32 0, %v784
      %v786 = vrot.slane %v781, %v785
      %v789 = vsel %vm580, %v771, 0
      %v792 = vsel %vm580, %v772, 0
      %794 = vmatprep.subr.mxu0 0.0
      %795 = vmatpush1.msra.mxu0 %v773
      %796 = vmatprep.subr.mxu0 0.0
      %797 = vmatpush1.msra.mxu0 %v774
      %798 = vmatprep.subr.mxu0 0.0
      %799 = vmatpush1.msra.mxu0 %v775
      %800 = vmatprep.subr.mxu0 0.0
      %801 = vmatpush1.msra.mxu0 %v776
      %802 = vmatprep.subr.mxu0 0.0
      %803 = vmatpush1.msra.mxu0 %v777
      %804 = vmatprep.subr.mxu0 0.0
      %805 = vmatpush1.msra.mxu0 %v778
      %806 = vmatprep.subr.mxu0 0.0
      %807 = vmatpush1.msra.mxu0 %v779
      %808 = vmatprep.subr.mxu0 0.0
      %809 = vmatpush1.msra.mxu0 %v780
      %810 = vmatprep.subr.mxu0 0.0
      %811 = vmatpush1.msra.mxu0 0.0
      %812 = vmatprep.subr.mxu0 0.0
      %813 = vmatpush1.msra.mxu0 0.0
      %814 = vmatprep.subr.mxu0 0.0
      %815 = vmatpush1.msra.mxu0 0.0
      %816 = vmatprep.subr.mxu0 0.0
      %817 = vmatpush1.msra.mxu0 0.0
      %818 = vmatprep.subr.mxu0 0.0
      %819 = vmatpush1.msra.mxu0 0.0
      %820 = vmatprep.subr.mxu0 0.0
      %821 = vmatpush1.msra.mxu0 0.0
      %822 = vmatprep.subr.mxu0 0.0
      %823 = vmatpush1.msra.mxu0 0.0
      %824 = vmatprep.subr.mxu0 0.0
      %825 = vmatpush1.msra.mxu0 0.0
      %826 = vmatprep.subr.mxu0 0.0
      %827 = vmatpush1.msra.mxu0 0.0
      %828 = vmatprep.subr.mxu0 0.0
      %829 = vmatpush1.msra.mxu0 0.0
      %830 = vmatprep.subr.mxu0 0.0
      %831 = vmatpush1.msra.mxu0 0.0
      %832 = vmatprep.subr.mxu0 0.0
      %833 = vmatpush1.msra.mxu0 0.0
      %834 = vmatprep.subr.mxu0 0.0
      %835 = vmatpush1.msra.mxu0 0.0
      %836 = vmatprep.subr.mxu0 0.0
      %837 = vmatpush1.msra.mxu0 0.0
      %838 = vmatprep.subr.mxu0 0.0
      %839 = vmatpush1.msra.mxu0 0.0
      %840 = vmatprep.subr.mxu0 0.0
      %841 = vmatpush1.msra.mxu0 0.0
      %842 = vmatprep.subr.mxu0 0.0
      %843 = vmatpush1.msra.mxu0 0.0
      %844 = vmatprep.subr.mxu0 0.0
      %845 = vmatpush1.msra.mxu0 0.0
      %846 = vmatprep.subr.mxu0 0.0
      %847 = vmatpush1.msra.mxu0 0.0
      %848 = vmatprep.subr.mxu0 0.0
      %849 = vmatpush1.msra.mxu0 0.0
      %850 = vmatprep.subr.mxu0 0.0
      %851 = vmatpush1.msra.mxu0 0.0
      %852 = vmatprep.subr.mxu0 0.0
      %853 = vmatpush1.msra.mxu0 0.0
      %854 = vmatprep.subr.mxu0 0.0
      %855 = vmatpush1.msra.mxu0 0.0
      %856 = vmatprep.subr.mxu0 0.0
      %857 = vmatpush1.msra.mxu0 0.0
      %858 = vmatprep.mubr.f32.mxu0 0.0
      %859 = vmatmul.mubr.f32.gmra.mrb[0].mxu0 %v789
      %v860 = vpop.f32.mrb[0].mxu0
      %v861 = vadd.f32 %v786, %v860
      %v862 = vpop.f32.mrb[0].mxu0
      %863 = vmatprep.mubr.f32.mxu0 0.0
      %864 = vmatmul.mubr.f32.gmra.mrb[0].mxu0 %v792
      %v865 = vpop.f32.mrb[0].mxu0
      %v866 = vadd.f32 %v786, %v865
      %v867 = vpop.f32.mrb[0].mxu0
      %868 = vdwg.mxu0
      %v869 = vmax.f32 %v861, 0.0
      %v870 = vmax.f32 %v866, 0.0
      %871 = vst.msk [vmem:[#allocation2 + $0x2] sm:$0xff] %vm550, %v869
      %872 = vst.msk [vmem:[#allocation2 + $0xa] sm:$0xff] %vm550, %v870
      %v873 = vld [vmem:[#allocation2] sm:$0xff]
      %v874 = vld [vmem:[#allocation2 + $0x8] sm:$0xff]
      %877 = vrot.lane.b32.xlu0 %v869, 32
      %v878 = vpop.permute.xlu0 %877
      %879 = vrot.lane.b32.xlu0 %v870, 32
      %v880 = vpop.permute.xlu0 %879
      %v883 = vsel %vm550, %v873, %v878
      %v884 = vsel %vm550, %v874, %v880
      %v885 = vld [vmem:[%s9] sm:$0xff]
      %v886 = vld [vmem:[%s9 + $0x8] sm:$0xff]
      %v887 = vld [vmem:[%s9 + $0x10] sm:$0xff]
      %v888 = vld [vmem:[%s9 + $0x18] sm:$0xff]
      %v889 = vld [vmem:[%s9 + $0x20] sm:$0xff]
      %v890 = vld [vmem:[%s9 + $0x28] sm:$0xff]
      %v891 = vld [vmem:[%s9 + $0x30] sm:$0xff]
      %v892 = vld [vmem:[%s9 + $0x38] sm:$0xff]
      %v893 = vld [vmem:[%s10] sm:$0x1]
      %v895 = vlaneseq
      %v896 = vshrl.u32 %v895, 7
      %v897 = vsub.s32 0, %v896
      %v898 = vrot.slane %v893, %v897
      %v901 = vsel %vm580, %v883, 0
      %v904 = vsel %vm580, %v884, 0
      %906 = vmatprep.subr.mxu0 0.0
      %907 = vmatpush1.msra.mxu0 %v885
      %908 = vmatprep.subr.mxu0 0.0
      %909 = vmatpush1.msra.mxu0 %v886
      %910 = vmatprep.subr.mxu0 0.0
      %911 = vmatpush1.msra.mxu0 %v887
      %912 = vmatprep.subr.mxu0 0.0
      %913 = vmatpush1.msra.mxu0 %v888
      %914 = vmatprep.subr.mxu0 0.0
      %915 = vmatpush1.msra.mxu0 %v889
      %916 = vmatprep.subr.mxu0 0.0
      %917 = vmatpush1.msra.mxu0 %v890
      %918 = vmatprep.subr.mxu0 0.0
      %919 = vmatpush1.msra.mxu0 %v891
      %920 = vmatprep.subr.mxu0 0.0
      %921 = vmatpush1.msra.mxu0 %v892
      %922 = vmatprep.subr.mxu0 0.0
      %923 = vmatpush1.msra.mxu0 0.0
      %924 = vmatprep.subr.mxu0 0.0
      %925 = vmatpush1.msra.mxu0 0.0
      %926 = vmatprep.subr.mxu0 0.0
      %927 = vmatpush1.msra.mxu0 0.0
      %928 = vmatprep.subr.mxu0 0.0
      %929 = vmatpush1.msra.mxu0 0.0
      %930 = vmatprep.subr.mxu0 0.0
      %931 = vmatpush1.msra.mxu0 0.0
      %932 = vmatprep.subr.mxu0 0.0
      %933 = vmatpush1.msra.mxu0 0.0
      %934 = vmatprep.subr.mxu0 0.0
      %935 = vmatpush1.msra.mxu0 0.0
      %936 = vmatprep.subr.mxu0 0.0
      %937 = vmatpush1.msra.mxu0 0.0
      %938 = vmatprep.subr.mxu0 0.0
      %939 = vmatpush1.msra.mxu0 0.0
      %940 = vmatprep.subr.mxu0 0.0
      %941 = vmatpush1.msra.mxu0 0.0
      %942 = vmatprep.subr.mxu0 0.0
      %943 = vmatpush1.msra.mxu0 0.0
      %944 = vmatprep.subr.mxu0 0.0
      %945 = vmatpush1.msra.mxu0 0.0
      %946 = vmatprep.subr.mxu0 0.0
      %947 = vmatpush1.msra.mxu0 0.0
      %948 = vmatprep.subr.mxu0 0.0
      %949 = vmatpush1.msra.mxu0 0.0
      %950 = vmatprep.subr.mxu0 0.0
      %951 = vmatpush1.msra.mxu0 0.0
      %952 = vmatprep.subr.mxu0 0.0
      %953 = vmatpush1.msra.mxu0 0.0
      %954 = vmatprep.subr.mxu0 0.0
      %955 = vmatpush1.msra.mxu0 0.0
      %956 = vmatprep.subr.mxu0 0.0
      %957 = vmatpush1.msra.mxu0 0.0
      %958 = vmatprep.subr.mxu0 0.0
      %959 = vmatpush1.msra.mxu0 0.0
      %960 = vmatprep.subr.mxu0 0.0
      %961 = vmatpush1.msra.mxu0 0.0
      %962 = vmatprep.subr.mxu0 0.0
      %963 = vmatpush1.msra.mxu0 0.0
      %964 = vmatprep.subr.mxu0 0.0
      %965 = vmatpush1.msra.mxu0 0.0
      %966 = vmatprep.subr.mxu0 0.0
      %967 = vmatpush1.msra.mxu0 0.0
      %968 = vmatprep.subr.mxu0 0.0
      %969 = vmatpush1.msra.mxu0 0.0
      %970 = vmatprep.mubr.f32.mxu0 0.0
      %971 = vmatmul.mubr.f32.gmra.mrb[0].mxu0 %v901
      %v972 = vpop.f32.mrb[0].mxu0
      %v973 = vpop.f32.mrb[0].mxu0
      %974 = vmatprep.mubr.f32.mxu0 0.0
      %975 = vmatmul.mubr.f32.gmra.mrb[0].mxu0 %v904
      %v976 = vpop.f32.mrb[0].mxu0
      %v977 = vadd.f32 %v898, %v976
      %v978 = vpop.f32.mrb[0].mxu0
      %979 = vdwg.mxu0
      %v980 = vmax.f32 %v977, 0.0
      %v981 = vadd.f32 %v980, %v758
      %v982 = vmax.f32 %v981, 0.0
      %v983 = vld [vmem:[%s11] sm:$0xff]
      %v984 = vld [vmem:[%s11 + $0x8] sm:$0xff]
      %v985 = vld [vmem:[%s11 + $0x10] sm:$0xff]
      %v986 = vld [vmem:[%s11 + $0x18] sm:$0xff]
      %v987 = vld [vmem:[#allocation3] sm:$0x1]
      %v989 = vrot.slane %v982, 7
      %v990 = vsel %vm550, %v989, 0
      %992 = vmatprep.subr.mxu0 0.0
      %993 = vmatpush1.msra.mxu0 %v983
      %994 = vmatprep.subr.mxu0 0.0
      %995 = vmatpush1.msra.mxu0 %v984
      %996 = vmatprep.subr.mxu0 0.0
      %997 = vmatpush1.msra.mxu0 %v985
      %998 = vmatprep.subr.mxu0 0.0
      %999 = vmatpush1.msra.mxu0 %v986
      %1000 = vmatprep.subr.mxu0 0.0
      %1001 = vmatpush1.msra.mxu0 0.0
      %1002 = vmatprep.subr.mxu0 0.0
      %1003 = vmatpush1.msra.mxu0 0.0
      %1004 = vmatprep.subr.mxu0 0.0
      %1005 = vmatpush1.msra.mxu0 0.0
      %1006 = vmatprep.subr.mxu0 0.0
      %1007 = vmatpush1.msra.mxu0 0.0
      %1008 = vmatprep.subr.mxu0 0.0
      %1009 = vmatpush1.msra.mxu0 0.0
      %1010 = vmatprep.subr.mxu0 0.0
      %1011 = vmatpush1.msra.mxu0 0.0
      %1012 = vmatprep.subr.mxu0 0.0
      %1013 = vmatpush1.msra.mxu0 0.0
      %1014 = vmatprep.subr.mxu0 0.0
      %1015 = vmatpush1.msra.mxu0 0.0
      %1016 = vmatprep.subr.mxu0 0.0
      %1017 = vmatpush1.msra.mxu0 0.0
      %1018 = vmatprep.subr.mxu0 0.0
      %1019 = vmatpush1.msra.mxu0 0.0
      %1020 = vmatprep.subr.mxu0 0.0
      %1021 = vmatpush1.msra.mxu0 0.0
      %1022 = vmatprep.subr.mxu0 0.0
      %1023 = vmatpush1.msra.mxu0 0.0
      %1024 = vmatprep.subr.mxu0 0.0
      %1025 = vmatpush1.msra.mxu0 0.0
      %1026 = vmatprep.subr.mxu0 0.0
      %1027 = vmatpush1.msra.mxu0 0.0
      %1028 = vmatprep.subr.mxu0 0.0
      %1029 = vmatpush1.msra.mxu0 0.0
      %1030 = vmatprep.subr.mxu0 0.0
      %1031 = vmatpush1.msra.mxu0 0.0
      %1032 = vmatprep.subr.mxu0 0.0
      %1033 = vmatpush1.msra.mxu0 0.0
      %1034 = vmatprep.subr.mxu0 0.0
      %1035 = vmatpush1.msra.mxu0 0.0
      %1036 = vmatprep.subr.mxu0 0.0
      %1037 = vmatpush1.msra.mxu0 0.0
      %1038 = vmatprep.subr.mxu0 0.0
      %1039 = vmatpush1.msra.mxu0 0.0
      %1040 = vmatprep.subr.mxu0 0.0
      %1041 = vmatpush1.msra.mxu0 0.0
      %1042 = vmatprep.subr.mxu0 0.0
      %1043 = vmatpush1.msra.mxu0 0.0
      %1044 = vmatprep.subr.mxu0 0.0
      %1045 = vmatpush1.msra.mxu0 0.0
      %1046 = vmatprep.subr.mxu0 0.0
      %1047 = vmatpush1.msra.mxu0 0.0
      %1048 = vmatprep.subr.mxu0 0.0
      %1049 = vmatpush1.msra.mxu0 0.0
      %1050 = vmatprep.subr.mxu0 0.0
      %1051 = vmatpush1.msra.mxu0 0.0
      %1052 = vmatprep.subr.mxu0 0.0
      %1053 = vmatpush1.msra.mxu0 0.0
      %1054 = vmatprep.subr.mxu0 0.0
      %1055 = vmatpush1.msra.mxu0 0.0
      %1056 = vmatprep.mubr.f32.mxu0 0.0
      %1057 = vmatmul.mubr.f32.gmra.mrb[0].mxu0 %v990
      %v1058 = vpop.f32.mrb[0].mxu0
      %v1059 = vadd.f32 %v987, %v1058
      %v1060 = vpop.f32.mrb[0].mxu0
      %1061 = vdwg.mxu0
      %vm1062 = vcmask 0
      %1063 = vst.msk [vmem:[%s438] sm:$0x1] %vm1062, %v1059
      %p1064 = scmp.lt.s32.totalorder %s26, 1
      %s1065 = scalar_select %p1064, %s26, 1
      %s1066 = scalar_lea.vmem %s13, %s1065
      // Predicated region
      $region73: #{tcn_forward.1} parent=71 // pred_check
        %p1067 = pneg %p322
      $region74: #{tcn_forward.1} parent=71 // pred_check_branch
        %1069 = sbr.rel (%p1067) target = $region76
      $region75: #{tcn_forward.1} parent=71 // pred_region
        _
      $region76: #{tcn_forward.1} parent=71 // pred_fallthru
        _
    $region72: #{tcn_forward.1} parent=5 // pred_fallthru
      _
    %p1070 = scmp.le.s32.totalorder 2, %s21
    // Predicated region
    $region77: #{tcn_forward.1} parent=5 // pred_check
      %p1071 = pneg %p1070
    $region78: #{tcn_forward.1} parent=5 // pred_check_branch
      %1073 = sbr.rel (%p1071) target = $region80
    $region79: #{tcn_forward.1} parent=5 // pred_region
      %s1074 = ssub.s32 %s21, 2
      // Predicated region
      $region81: #{tcn_forward.1} parent=79 // pred_check
        %p1075 = pneg %p328
      $region82: #{tcn_forward.1} parent=79 // pred_check_branch
        %1077 = sbr.rel (%p1075) target = $region84
      $region83: #{tcn_forward.1} parent=79 // pred_region
        %p1078 = scmp.lt.s32.totalorder %s27, 1
        %s1079 = scalar_select %p1078, %s27, 1
        %s1080 = scalar_lea.vmem %s13, %s1079
      $region84: #{tcn_forward.1} parent=79 // pred_fallthru
        _
    $region80: #{tcn_forward.1} parent=5 // pred_fallthru
      _
  $region6: #{tcn_forward.1} parent=0 // loop_footer
    %s25 = sadd.s32 1, %s21
  $region7: #{tcn_forward.1} parent=0 // loop_footer_branch
    %20 = sbr.rel target = $region3
  $region8: #{tcn_forward.1} parent=0 // loop_exit
    _

</llo_original>
